<compile_context>
chip_gen: v6e
topology: v6e:2x2x1
jax: 0.10.0
libtpu: 0.0.40
codegen_flags: <defaults>
</compile_context>

<pallas_src>
import jax
import jax.numpy as jnp
from jax.experimental import pallas as pl
from jax.experimental.pallas import tpu as pltpu


def _round_up(n, m):
    return ((n + m - 1) // m) * m


def _tpu_generation_defaults():
    """Generation-tuned (tm, tn, vmem_limit_bytes).

    Weights are re-read from HBM once per M-tile, so intensity ~= tm
    FLOPs/byte; tm must cross the per-generation compute/memory roofline.
    """
    try:
        vmem_cap = int(pltpu.get_tpu_info().vmem_capacity_bytes)
    except Exception:
        vmem_cap = 128 * 1024 * 1024
    try:
        kind = jax.devices()[0].device_kind.lower()
    except Exception:
        kind = ""
    vmem_limit = int(0.85 * vmem_cap)

    if "v5" in kind:     # v5e: 197 TF/s / ~0.82 TB/s -> tm >= ~240; spend VMEM on tn
        return 256, 1024, vmem_limit
    if "v6" in kind:     # v6e: 918 TF/s / ~1.4 TB/s -> tm >= ~650
        return 1024, 1024, vmem_limit
    if "v7" in kind:     # v7x: 996 TF/s / 3.2 TB/s per TC -> tm >= ~320; only 64 MiB VMEM
        return 512, 512, min(vmem_limit, 56 * 1024 * 1024)
    # Unknown generation: conservative.
    return 512, 512, min(vmem_limit, 64 * 1024 * 1024)


def _ffn_kernel(x_ref, w1_ref, b1_ref, w2_ref, b2_ref, o_ref, acc_ref):
    # x_ref:  (tm, d_model_p)         compute dtype (bf16 or f32)
    # w1_ref: (d_model_p, tn)         compute dtype (chunk-major slab, squeezed)
    # b1_ref: (1, tn)                 f32
    # w2_ref: (tn, d_model_p)         compute dtype
    # b2_ref: (1, d_model_p)          f32
    # o_ref:  (tm, d_model_p)         output dtype
    # acc_ref:(tm, d_model_p)         f32 accumulator (resident across k)
    k = pl.program_id(1)

    @pl.when(k == 0)
    def _():
        acc_ref[...] = jnp.zeros_like(acc_ref)

    # First matmul for this hidden chunk, f32 accumulation on the MXU.
    h = jnp.dot(x_ref[...], w1_ref[...],
                preferred_element_type=jnp.float32) + b1_ref[...]
    # SiLU in f32 (EUP sigmoid), fused per chunk.
    h = h * jax.nn.sigmoid(h)
    # Second matmul chunk, accumulate into the resident f32 scratch.
    acc_ref[...] += jnp.dot(h.astype(w2_ref.dtype), w2_ref[...],
                            preferred_element_type=jnp.float32)

    @pl.when(k == pl.num_programs(1) - 1)
    def _():
        o_ref[...] = (acc_ref[...] + b2_ref[...]).astype(o_ref.dtype)


def prepare_ffn_weights(w1, b1, w2, b2, *, tn=None,
                        compute_dtype=jnp.bfloat16):
    """One-time weight prep (pad, cast, chunk-major W1). Cache at model load."""
    d_model, hidden = w1.shape
    if tn is None:
        _, tn, _ = _tpu_generation_defaults()

    d_model_p = _round_up(d_model, 128)
    tn = min(tn, _round_up(hidden, 128))
    hidden_p = _round_up(hidden, tn)
    n_chunks = hidden_p // tn

    w1p = jnp.pad(w1, ((0, d_model_p - d_model), (0, hidden_p - hidden)))
    # Chunk-major layout: chunk k == W1[:, k*tn:(k+1)*tn], contiguous in HBM.
    w1c = (w1p.reshape(d_model_p, n_chunks, tn)
              .transpose(1, 0, 2)
              .astype(compute_dtype))
    w2p = jnp.pad(w2, ((0, hidden_p - hidden),
                       (0, d_model_p - d_model))).astype(compute_dtype)
    b1p = jnp.pad(b1, ((0, hidden_p - hidden),)
                  ).astype(jnp.float32).reshape(1, hidden_p)
    b2p = jnp.pad(b2, ((0, d_model_p - d_model),)
                  ).astype(jnp.float32).reshape(1, d_model_p)

    return dict(w1c=w1c, b1=b1p, w2=w2p, b2=b2p,
                d_model=d_model, hidden=hidden,
                d_model_p=d_model_p, hidden_p=hidden_p, tn=tn,
                compute_dtype=compute_dtype)


def feed_forward(x, params, *, tm=None, vmem_limit_bytes=None):
    """x: (..., d_model); params from prepare_ffn_weights().

    Returns same shape/dtype as x (dropout = identity / eval mode).
    """
    d_model = params["d_model"]
    d_model_p = params["d_model_p"]
    hidden_p = params["hidden_p"]
    tn = params["tn"]
    compute_dtype = params["compute_dtype"]

    orig_shape = x.shape
    out_dtype = x.dtype

    def_tm, _, def_vmem = _tpu_generation_defaults()
    if tm is None:
        tm = def_tm
    if vmem_limit_bytes is None:
        vmem_limit_bytes = def_vmem

    x2d = x.reshape(-1, d_model)
    M = x2d.shape[0]

    # Row-tile clamp: bf16 packs 16 rows per vreg tile, f32 packs 8.
    row_pack = 16 if jnp.dtype(compute_dtype).itemsize == 2 else 8
    tm = max(row_pack, min(tm, _round_up(M, row_pack)))

    # Shrink tm until double-buffered tiles + f32 accumulator fit VMEM budget.
    cdt = jnp.dtype(compute_dtype).itemsize
    odt = jnp.dtype(out_dtype).itemsize

    def vmem_use(tm_):
        return (2 * tm_ * d_model_p * cdt          # x tile (double-buffered)
                + 2 * d_model_p * tn * cdt         # W1 chunk
                + 2 * tn * d_model_p * cdt         # W2 chunk
                + 2 * tm_ * d_model_p * odt        # output tile
                + tm_ * d_model_p * 4              # f32 accumulator
                + 4 * (tn + d_model_p) * 4)        # biases

    budget = int(0.8 * vmem_limit_bytes)
    while tm > row_pack and vmem_use(tm) > budget:
        tm = max(row_pack, tm // 2)

    M_p = _round_up(M, tm)
    x2d = jnp.pad(x2d, ((0, M_p - M),
                        (0, d_model_p - d_model))).astype(compute_dtype)

    grid = (M_p // tm, hidden_p // tn)

    out = pl.pallas_call(
        _ffn_kernel,
        out_shape=jax.ShapeDtypeStruct((M_p, d_model_p), out_dtype),
        grid_spec=pltpu.PrefetchScalarGridSpec(
            num_scalar_prefetch=0,
            grid=grid,
            in_specs=[
                pl.BlockSpec((tm, d_model_p), lambda i, k: (i, 0)),      # x
                pl.BlockSpec((pl.Squeezed(), d_model_p, tn),             # W1 chunk
                             lambda i, k: (k, 0, 0)),
                pl.BlockSpec((1, tn), lambda i, k: (0, k)),              # b1 chunk
                pl.BlockSpec((tn, d_model_p), lambda i, k: (k, 0)),      # W2 chunk
                pl.BlockSpec((1, d_model_p), lambda i, k: (0, 0)),       # b2
            ],
            out_specs=pl.BlockSpec((tm, d_model_p), lambda i, k: (i, 0)),
            scratch_shapes=[pltpu.VMEM((tm, d_model_p), jnp.float32)],
        ),
        compiler_params=pltpu.CompilerParams(
            dimension_semantics=("parallel", "arbitrary"),
            vmem_limit_bytes=vmem_limit_bytes),
    )(x2d, params["w1c"], params["b1"], params["w2"], params["b2"])

    return out[:M, :d_model].reshape(orig_shape)


if __name__ == "__main__":
    # Small shapes consistent with the module: (batch, seq, d_model)
    batch, seq, d_model = 2, 8, 32
    hidden = 4 * d_model  # 128
    dropout = 0.1  # unused at inference (identity)

    key = jax.random.PRNGKey(0)
    kx, k1, k2, k3, k4 = jax.random.split(key, 5)

    x = jax.random.normal(kx, (batch, seq, d_model), dtype=jnp.float32)

    # Deterministic parameter init (PyTorch-like scale), stored as (in, out).
    w1 = jax.random.uniform(k1, (d_model, hidden), jnp.float32,
                            -1.0, 1.0) / jnp.sqrt(d_model)
    b1 = jax.random.uniform(k2, (hidden,), jnp.float32,
                            -1.0, 1.0) / jnp.sqrt(d_model)
    w2 = jax.random.uniform(k3, (hidden, d_model), jnp.float32,
                            -1.0, 1.0) / jnp.sqrt(hidden)
    b2 = jax.random.uniform(k4, (d_model,), jnp.float32,
                            -1.0, 1.0) / jnp.sqrt(hidden)

    # Reference in plain JAX (dropout = identity in eval mode).
    h_ref = x.reshape(-1, d_model) @ w1 + b1
    h_ref = h_ref * jax.nn.sigmoid(h_ref)
    y_ref = (h_ref @ w2 + b2).reshape(x.shape)

    # Exact-path check (f32 matmul operands).
    params_f32 = prepare_ffn_weights(w1, b1, w2, b2,
                                     compute_dtype=jnp.float32)
    y_f32 = feed_forward(x, params_f32)
    jax.block_until_ready(y_f32)
    assert jnp.allclose(y_f32, y_ref, atol=1e-5, rtol=1e-5), \
        "f32 path mismatch vs reference"

    # Default fast path (bf16 operands, f32 accumulation, chunk-major W1),
    # with weight prep hoisted out of the call (done once here).
    params_bf16 = prepare_ffn_weights(w1, b1, w2, b2)
    y_bf16 = feed_forward(x, params_bf16)
    jax.block_until_ready(y_bf16)
    assert jnp.allclose(y_bf16, y_ref, atol=5e-2, rtol=5e-2), \
        "bf16 path mismatch vs reference"

    print("KERNEL_OK")
</pallas_src>

<mosaic_0001>
module attributes {stable_mosaic.version = 11 : i64} {
  func.func @_ffn_kernel(%arg0: i32, %arg1: i32, %arg2: memref<16x128xf32, #tpu.memory_space<vmem>>, %arg3: memref<1x128x128xf32, #tpu.memory_space<vmem>>, %arg4: memref<1x128xf32, #tpu.memory_space<vmem>>, %arg5: memref<128x128xf32, #tpu.memory_space<vmem>>, %arg6: memref<1x128xf32, #tpu.memory_space<vmem>>, %arg7: memref<16x128xf32, #tpu.memory_space<vmem>>, %arg8: memref<16x128xf32, #tpu.memory_space<vmem>>) attributes {dimension_semantics = [#tpu.dimension_semantics<parallel>, #tpu.dimension_semantics<arbitrary>], iteration_bounds = array<i64: 1, 1>, scalar_prefetch = 0 : i64, scratch_operands = 1 : i64, tpu.core_type = #tpu.core_type<tc>, window_params = [{transform_indices = @transform_0, window_bounds = array<i64: 16, 128>}, {transform_indices = @transform_1, window_bounds = array<i64: 1, 128, 128>}, {transform_indices = @transform_2, window_bounds = array<i64: 1, 128>}, {transform_indices = @transform_3, window_bounds = array<i64: 128, 128>}, {pipeline_mode = #tpu.pipeline_mode<synchronous>, transform_indices = @transform_4, window_bounds = array<i64: 1, 128>}, {transform_indices = @transform_5, window_bounds = array<i64: 16, 128>}]} {
    %c0_i32 = arith.constant 0 : i32
    %0 = arith.cmpi eq, %arg1, %c0_i32 : i32
    %1 = arith.extui %0 : i1 to i32
    %c0_i32_0 = arith.constant 0 : i32
    %2 = arith.cmpi ne, %1, %c0_i32_0 : i32
    scf.if %2 {
      %cst_17 = arith.constant 0.000000e+00 : f32
      %24 = vector.broadcast %cst_17 : f32 to vector<16x128xf32>
      %c0_18 = arith.constant 0 : index
      %c0_19 = arith.constant 0 : index
      %25 = vector.load %arg8[%c0_18, %c0_19] : memref<16x128xf32, #tpu.memory_space<vmem>>, vector<16x128xf32>
      tpu.vector_store %arg8[%c0_18, %c0_19], %24 {strides = array<i32>} : memref<16x128xf32, #tpu.memory_space<vmem>>, vector<16x128xf32>,
    } else {
    }
    %c0 = arith.constant 0 : index
    %c0_1 = arith.constant 0 : index
    %3 = vector.load %arg2[%c0, %c0_1] : memref<16x128xf32, #tpu.memory_space<vmem>>, vector<16x128xf32>
    %c0_2 = arith.constant 0 : index
    %c0_3 = arith.constant 0 : index
    %c0_4 = arith.constant 0 : index
    %4 = vector.load %arg3[%c0_2, %c0_3, %c0_4] : memref<1x128x128xf32, #tpu.memory_space<vmem>>, vector<1x128x128xf32>
    %5 = vector.shape_cast %4 : vector<1x128x128xf32> to vector<128x128xf32>
    %cst = arith.constant dense<0.000000e+00> : vector<16x128xf32>
    %6 = tpu.matmul %3, %5, %cst {dimension_numbers = #tpu.dot_dimension_numbers<[1], [0], [0], [1], [0, 0, 1, 1], [], []>} : vector<16x128xf32>, vector<128x128xf32>, vector<16x128xf32> -> vector<16x128xf32>
    %c0_5 = arith.constant 0 : index
    %c0_6 = arith.constant 0 : index
    %7 = vector.load %arg4[%c0_5, %c0_6] : memref<1x128xf32, #tpu.memory_space<vmem>>, vector<1x128xf32>
    %8 = vector.broadcast %7 : vector<1x128xf32> to vector<16x128xf32>
    %9 = arith.addf %6, %8 : vector<16x128xf32>
    %10 = arith.negf %9 : vector<16x128xf32>
    %11 = math.exp %10 : vector<16x128xf32>
    %cst_7 = arith.constant 1.000000e+00 : f32
    %12 = vector.broadcast %cst_7 : f32 to vector<16x128xf32>
    %13 = arith.addf %12, %11 : vector<16x128xf32>
    %14 = arith.divf %12, %13 : vector<16x128xf32>
    %15 = arith.mulf %9, %14 : vector<16x128xf32>
    %c0_8 = arith.constant 0 : index
    %c0_9 = arith.constant 0 : index
    %16 = vector.load %arg8[%c0_8, %c0_9] : memref<16x128xf32, #tpu.memory_space<vmem>>, vector<16x128xf32>
    %c0_10 = arith.constant 0 : index
    %c0_11 = arith.constant 0 : index
    %17 = vector.load %arg5[%c0_10, %c0_11] : memref<128x128xf32, #tpu.memory_space<vmem>>, vector<128x128xf32>
    %cst_12 = arith.constant dense<0.000000e+00> : vector<16x128xf32>
    %18 = tpu.matmul %15, %17, %cst_12 {dimension_numbers = #tpu.dot_dimension_numbers<[1], [0], [0], [1], [0, 0, 1, 1], [], []>} : vector<16x128xf32>, vector<128x128xf32>, vector<16x128xf32> -> vector<16x128xf32>
    %19 = arith.addf %16, %18 : vector<16x128xf32>
    %c0_13 = arith.constant 0 : index
    %c0_14 = arith.constant 0 : index
    %20 = vector.load %arg8[%c0_13, %c0_14] : memref<16x128xf32, #tpu.memory_space<vmem>>, vector<16x128xf32>
    tpu.vector_store %arg8[%c0_13, %c0_14], %19 {strides = array<i32>} : memref<16x128xf32, #tpu.memory_space<vmem>>, vector<16x128xf32>,
    %c0_i32_15 = arith.constant 0 : i32
    %21 = arith.cmpi eq, %arg1, %c0_i32_15 : i32
    %22 = arith.extui %21 : i1 to i32
    %c0_i32_16 = arith.constant 0 : i32
    %23 = arith.cmpi ne, %22, %c0_i32_16 : i32
    scf.if %23 {
      %c0_17 = arith.constant 0 : index
      %c0_18 = arith.constant 0 : index
      %24 = vector.load %arg8[%c0_17, %c0_18] : memref<16x128xf32, #tpu.memory_space<vmem>>, vector<16x128xf32>
      %c0_19 = arith.constant 0 : index
      %c0_20 = arith.constant 0 : index
      %25 = vector.load %arg6[%c0_19, %c0_20] : memref<1x128xf32, #tpu.memory_space<vmem>>, vector<1x128xf32>
      %26 = vector.broadcast %25 : vector<1x128xf32> to vector<16x128xf32>
      %27 = arith.addf %24, %26 : vector<16x128xf32>
      %c0_21 = arith.constant 0 : index
      %c0_22 = arith.constant 0 : index
      %28 = vector.load %arg7[%c0_21, %c0_22] : memref<16x128xf32, #tpu.memory_space<vmem>>, vector<16x128xf32>
      tpu.vector_store %arg7[%c0_21, %c0_22], %27 {strides = array<i32>} : memref<16x128xf32, #tpu.memory_space<vmem>>, vector<16x128xf32>,
    } else {
    }
    return
  }
  func.func @transform_0(%arg0: i32, %arg1: i32) -> (i32, i32) {
    %c0_i32 = arith.constant 0 : i32
    %c0_i32_0 = arith.constant 0 : i32
    return %arg0, %c0_i32 : i32, i32
  }
  func.func @transform_1(%arg0: i32, %arg1: i32) -> (i32, i32, i32) {
    %c0_i32 = arith.constant 0 : i32
    %c0_i32_0 = arith.constant 0 : i32
    %c0_i32_1 = arith.constant 0 : i32
    return %arg1, %c0_i32, %c0_i32_0 : i32, i32, i32
  }
  func.func @transform_2(%arg0: i32, %arg1: i32) -> (i32, i32) {
    %c0_i32 = arith.constant 0 : i32
    %c0_i32_0 = arith.constant 0 : i32
    return %c0_i32, %arg1 : i32, i32
  }
  func.func @transform_3(%arg0: i32, %arg1: i32) -> (i32, i32) {
    %c0_i32 = arith.constant 0 : i32
    %c0_i32_0 = arith.constant 0 : i32
    return %arg1, %c0_i32 : i32, i32
  }
  func.func @transform_4(%arg0: i32, %arg1: i32) -> (i32, i32) {
    %c0_i32 = arith.constant 0 : i32
    %c0_i32_0 = arith.constant 0 : i32
    %c0_i32_1 = arith.constant 0 : i32
    return %c0_i32, %c0_i32_0 : i32, i32
  }
  func.func @transform_5(%arg0: i32, %arg1: i32) -> (i32, i32) {
    %c0_i32 = arith.constant 0 : i32
    %c0_i32_0 = arith.constant 0 : i32
    return %arg0, %c0_i32 : i32, i32
  }
}

</mosaic_0001>

<llo_original>
// kernel: tpu_custom_call.1
$region0: #{tpu_custom_call.1}
  #allocation0 [shape = 'u32[]', space=smem, size = 0x4, offset = 0x4, fixed_abs, tag = 'smem constant byte address 0x4 - core index']
  #allocation1 [shape = 'u32[144,128]{1,0:T(1,128)}', space=vmem, size = 0x12000, scoped, tag = 'internal scratch']
  #allocation2 [shape = 'f32[16,128]{1,0:T(8,128)}', space=vmem, size = 0x2000, scoped, tag = 'scratch operand']
  %s0 = inlined_call_operand.hbm [shape: f32[16,128], index: 0, kind: input, shape index: {}]
  %s1 = inlined_call_operand.hbm [shape: f32[1,128,128], index: 1, kind: input, shape index: {}]
  %s2 = inlined_call_operand.vmem [shape: f32[1,128], index: 2, kind: input, shape index: {}]
  %s3 = inlined_call_operand.hbm [shape: f32[128,128], index: 3, kind: input, shape index: {}]
  %s4 = inlined_call_operand.vmem [shape: f32[1,128], index: 4, kind: input, shape index: {}]
  %s5 = inlined_call_operand.hbm [shape: f32[16,128], index: 5, kind: output, shape index: {}]
  %s6 = sld [smem:[#allocation0]]
  $region50: #{tpu_custom_call.1} parent=0
    _
  %s8 = ssub.s32 1, %s6
  %s9 = scalar_select 0, %s8, %s6
  $region1: #{tpu_custom_call.1} parent=0
    #allocation3 [shape = 'u8[8192]{0}', space=vmem, size = 0x2000, scoped, tag = 'input window, operand 0, single buffered']
    #allocation4 [shape = 's32[1]{0}', space=sflag, size = 0x4, scoped, tag = 'scoped memory for tpu_custom_call.1']
    #allocation5 [shape = 's32[1]{0}', space=sflag, size = 0x4, scoped, tag = 'scoped memory for tpu_custom_call.1']
    #allocation6 [shape = 'u8[65536]{0}', space=vmem, size = 0x10000, scoped, tag = 'input window, operand 1, single buffered']
    #allocation7 [shape = 's32[1]{0}', space=sflag, size = 0x4, scoped, tag = 'scoped memory for tpu_custom_call.1']
    #allocation8 [shape = 'u8[65536]{0}', space=vmem, size = 0x10000, scoped, tag = 'input window, operand 3, single buffered']
    #allocation9 [shape = 'u8[8192]{0}', space=vmem, size = 0x2000, scoped, tag = 'output window, operand 0, single buffered']
    %10 = vsyncpa [#allocation4], 0
    %11 = vsyncpa [#allocation7], 0
    %12 = vsyncpa [#allocation5], 0
    // Predicated region
    $region2: #{tpu_custom_call.1} parent=1 // pred_check
      _
    $region3: #{tpu_custom_call.1} parent=1 // pred_check_branch
      %14 = sbr.rel (0) target = $region5
    $region4: #{tpu_custom_call.1} parent=1 // pred_region
      %s16 = ssub.s32 256, 256
      %17 = vsyncadd [#allocation4], %s16
      %s18 = sshll.u32 [#allocation3], 4
      %s19 = int_to_ptr.vmem [resolvable:$true] %s18
      %24 = dma.hbm_to_vmem [thread:$0]  %s0, 256, %s19, [#allocation4], 128, 128, 8
    $region5: #{tpu_custom_call.1} parent=1 // pred_fallthru
      _
    // Predicated region
    $region6: #{tpu_custom_call.1} parent=1 // pred_check
      _
    $region7: #{tpu_custom_call.1} parent=1 // pred_check_branch
      %26 = sbr.rel (0) target = $region9
    $region8: #{tpu_custom_call.1} parent=1 // pred_region
      %s28 = ssub.s32 2048, 2048
      %29 = vsyncadd [#allocation7], %s28
      %s30 = sshll.u32 [#allocation6], 4
      %s31 = int_to_ptr.vmem [resolvable:$true] %s30
      %36 = dma.hbm_to_vmem [thread:$0]  %s1, 2048, %s31, [#allocation7], 128, 128, 8
    $region9: #{tpu_custom_call.1} parent=1 // pred_fallthru
      _
    // Predicated region
    $region10: #{tpu_custom_call.1} parent=1 // pred_check
      _
    $region11: #{tpu_custom_call.1} parent=1 // pred_check_branch
      %38 = sbr.rel (0) target = $region13
    $region12: #{tpu_custom_call.1} parent=1 // pred_region
      _
    $region13: #{tpu_custom_call.1} parent=1 // pred_fallthru
      _
    // Predicated region
    $region14: #{tpu_custom_call.1} parent=1 // pred_check
      _
    $region15: #{tpu_custom_call.1} parent=1 // pred_check_branch
      %40 = sbr.rel (0) target = $region17
    $region16: #{tpu_custom_call.1} parent=1 // pred_region
      %s42 = ssub.s32 2048, 2048
      %43 = vsyncadd [#allocation7], %s42
      %s44 = sshll.u32 [#allocation8], 4
      %s45 = int_to_ptr.vmem [resolvable:$true] %s44
      %50 = dma.hbm_to_vmem [thread:$0]  %s3, 2048, %s45, [#allocation7], 128, 128, 8
    $region17: #{tpu_custom_call.1} parent=1 // pred_fallthru
      _
    // Predicated region
    $region18: #{tpu_custom_call.1} parent=1 // pred_check
      _
    $region19: #{tpu_custom_call.1} parent=1 // pred_check_branch
      %52 = sbr.rel (0) target = $region21
    $region20: #{tpu_custom_call.1} parent=1 // pred_region
      _
    $region21: #{tpu_custom_call.1} parent=1 // pred_fallthru
      _
    // Predicated region
    $region22: #{tpu_custom_call.1} parent=1 // pred_check
      _
    $region23: #{tpu_custom_call.1} parent=1 // pred_check_branch
      %54 = sbr.rel (0) target = $region25
    $region24: #{tpu_custom_call.1} parent=1 // pred_region
      %55 = dma.done [#allocation4], 256
    $region25: #{tpu_custom_call.1} parent=1 // pred_fallthru
      _
    // Predicated region
    $region26: #{tpu_custom_call.1} parent=1 // pred_check
      _
    $region27: #{tpu_custom_call.1} parent=1 // pred_check_branch
      %57 = sbr.rel (0) target = $region29
    $region28: #{tpu_custom_call.1} parent=1 // pred_region
      %58 = dma.done [#allocation7], 2048
    $region29: #{tpu_custom_call.1} parent=1 // pred_fallthru
      _
    // Predicated region
    $region30: #{tpu_custom_call.1} parent=1 // pred_check
      _
    $region31: #{tpu_custom_call.1} parent=1 // pred_check_branch
      %60 = sbr.rel (0) target = $region33
    $region32: #{tpu_custom_call.1} parent=1 // pred_region
      %61 = dma.done [#allocation7], 2048
    $region33: #{tpu_custom_call.1} parent=1 // pred_fallthru
      _
    %p62 = scmp.eq.s32.totalorder 0, 0
    // Predicated region
    $region34: #{tpu_custom_call.1} parent=1 // pred_check
      %p63 = pneg %p62
    $region35: #{tpu_custom_call.1} parent=1 // pred_check_branch
      %65 = sbr.rel (%p63) target = $region37
    $region36: #{tpu_custom_call.1} parent=1 // pred_region
      %66 = vst [vmem:[#allocation2] sm:$0xff] 0.0
      %67 = vst [vmem:[#allocation2 + $0x8] sm:$0xff] 0.0
    $region37: #{tpu_custom_call.1} parent=1 // pred_fallthru
      _
    %v68 = vld [vmem:[#allocation3] sm:$0xff]
    %v69 = vld [vmem:[#allocation3 + $0x8] sm:$0xff]
    %v70 = vld [vmem:[#allocation6] sm:$0xff]
    %v71 = vld [vmem:[#allocation6 + $0x8] sm:$0xff]
    %v72 = vld [vmem:[#allocation6 + $0x10] sm:$0xff]
    %v73 = vld [vmem:[#allocation6 + $0x18] sm:$0xff]
    %v74 = vld [vmem:[#allocation6 + $0x20] sm:$0xff]
    %v75 = vld [vmem:[#allocation6 + $0x28] sm:$0xff]
    %v76 = vld [vmem:[#allocation6 + $0x30] sm:$0xff]
    %v77 = vld [vmem:[#allocation6 + $0x38] sm:$0xff]
    %v78 = vld [vmem:[#allocation6 + $0x40] sm:$0xff]
    %v79 = vld [vmem:[#allocation6 + $0x48] sm:$0xff]
    %v80 = vld [vmem:[#allocation6 + $0x50] sm:$0xff]
    %v81 = vld [vmem:[#allocation6 + $0x58] sm:$0xff]
    %v82 = vld [vmem:[#allocation6 + $0x60] sm:$0xff]
    %v83 = vld [vmem:[#allocation6 + $0x68] sm:$0xff]
    %v84 = vld [vmem:[#allocation6 + $0x70] sm:$0xff]
    %v85 = vld [vmem:[#allocation6 + $0x78] sm:$0xff]
    %v86 = vld [vmem:[%s2] sm:$0x1]
    %v88 = vlaneseq
    %v89 = vshrl.u32 %v88, 7
    %v90 = vsub.s32 0, %v89
    %v91 = vrot.slane %v86, %v90
    %93 = vmatprep.subr.mxu0 0.0
    %94 = vmatpush1.msra.mxu0 %v85
    %95 = vmatprep.subr.mxu0 0.0
    %96 = vmatpush1.msra.mxu0 %v84
    %97 = vmatprep.subr.mxu0 0.0
    %98 = vmatpush1.msra.mxu0 %v83
    %99 = vmatprep.subr.mxu0 0.0
    %100 = vmatpush1.msra.mxu0 %v82
    %101 = vmatprep.subr.mxu0 0.0
    %102 = vmatpush1.msra.mxu0 %v81
    %103 = vmatprep.subr.mxu0 0.0
    %104 = vmatpush1.msra.mxu0 %v80
    %105 = vmatprep.subr.mxu0 0.0
    %106 = vmatpush1.msra.mxu0 %v79
    %107 = vmatprep.subr.mxu0 0.0
    %108 = vmatpush1.msra.mxu0 %v78
    %109 = vmatprep.subr.mxu0 0.0
    %110 = vmatpush1.msra.mxu0 %v77
    %111 = vmatprep.subr.mxu0 0.0
    %112 = vmatpush1.msra.mxu0 %v76
    %113 = vmatprep.subr.mxu0 0.0
    %114 = vmatpush1.msra.mxu0 %v75
    %115 = vmatprep.subr.mxu0 0.0
    %116 = vmatpush1.msra.mxu0 %v74
    %117 = vmatprep.subr.mxu0 0.0
    %118 = vmatpush1.msra.mxu0 %v73
    %119 = vmatprep.subr.mxu0 0.0
    %120 = vmatpush1.msra.mxu0 %v72
    %121 = vmatprep.subr.mxu0 0.0
    %122 = vmatpush1.msra.mxu0 %v71
    %123 = vmatprep.subr.mxu0 0.0
    %124 = vmatpush1.msra.mxu0 %v70
    %125 = vmatprep.subr.mxu0 0.0
    %126 = vmatpush2.msra.mxu0 0.0
    %127 = vmatprep.subr.mxu0 0.0
    %128 = vmatpush2.msra.mxu0 0.0
    %129 = vmatprep.subr.mxu0 0.0
    %130 = vmatpush2.msra.mxu0 0.0
    %131 = vmatprep.subr.mxu0 0.0
    %132 = vmatpush2.msra.mxu0 0.0
    %133 = vmatprep.subr.mxu0 0.0
    %134 = vmatpush2.msra.mxu0 0.0
    %135 = vmatprep.subr.mxu0 0.0
    %136 = vmatpush2.msra.mxu0 0.0
    %137 = vmatprep.subr.mxu0 0.0
    %138 = vmatpush2.msra.mxu0 0.0
    %139 = vmatprep.subr.mxu0 0.0
    %140 = vmatpush2.msra.mxu0 0.0
    %141 = vmatprep.subr.mxu0 0.0
    %142 = vmatpush2.msra.mxu0 0.0
    %143 = vmatprep.subr.mxu0 0.0
    %144 = vmatpush2.msra.mxu0 0.0
    %145 = vmatprep.subr.mxu0 0.0
    %146 = vmatpush2.msra.mxu0 0.0
    %147 = vmatprep.subr.mxu0 0.0
    %148 = vmatpush2.msra.mxu0 0.0
    %149 = vmatprep.subr.mxu0 0.0
    %150 = vmatpush2.msra.mxu0 0.0
    %151 = vmatprep.subr.mxu0 0.0
    %152 = vmatpush2.msra.mxu0 0.0
    %153 = vmatprep.subr.mxu0 0.0
    %154 = vmatpush2.msra.mxu0 0.0
    %155 = vmatprep.subr.mxu0 0.0
    %156 = vmatpush2.msra.mxu0 0.0
    %157 = vmatprep.mubr.f32.mxu0 0.0
    %158 = vmatmul.mubr.f32.gmra.mxu0 %v68
    %v159 = vpop.f32.mrf.mxu0
    %v160 = vadd.f32 %v91, %v159
    %v161 = vpop.f32.mrf.mxu0
    %162 = vmatprep.mubr.f32.mxu0 0.0
    %163 = vmatmul.mubr.f32.gmra.mxu0 %v69
    %v164 = vpop.f32.mrf.mxu0
    %v165 = vadd.f32 %v91, %v164
    %v166 = vpop.f32.mrf.mxu0
    %167 = vdwg.mxu0
    %v168 = vxor.u32 %v160, 2147483648
    %v169 = vxor.u32 %v165, 2147483648
    %v170 = vmul.f32 %v168, 1.442695
    %v171 = vpow.pop %v170
    %v172 = vmul.f32 %v169, 1.442695
    %v173 = vpow.pop %v172
    %v174 = vadd.f32 %v171, 1.0
    %v175 = vadd.f32 %v173, 1.0
    %v176 = vrcp.pop %v174
    %v177 = vmul.f32 1.0, %v176
    %v178 = vrcp.pop %v175
    %v179 = vmul.f32 1.0, %v178
    %v180 = vmul.f32 %v160, %v177
    %v181 = vmul.f32 %v165, %v179
    %v182 = vld [vmem:[#allocation2] sm:$0xff]
    %v183 = vld [vmem:[#allocation2 + $0x8] sm:$0xff]
    %v184 = vld [vmem:[#allocation8] sm:$0xff]
    %v185 = vld [vmem:[#allocation8 + $0x8] sm:$0xff]
    %v186 = vld [vmem:[#allocation8 + $0x10] sm:$0xff]
    %v187 = vld [vmem:[#allocation8 + $0x18] sm:$0xff]
    %v188 = vld [vmem:[#allocation8 + $0x20] sm:$0xff]
    %v189 = vld [vmem:[#allocation8 + $0x28] sm:$0xff]
    %v190 = vld [vmem:[#allocation8 + $0x30] sm:$0xff]
    %v191 = vld [vmem:[#allocation8 + $0x38] sm:$0xff]
    %v192 = vld [vmem:[#allocation8 + $0x40] sm:$0xff]
    %v193 = vld [vmem:[#allocation8 + $0x48] sm:$0xff]
    %v194 = vld [vmem:[#allocation8 + $0x50] sm:$0xff]
    %v195 = vld [vmem:[#allocation8 + $0x58] sm:$0xff]
    %v196 = vld [vmem:[#allocation8 + $0x60] sm:$0xff]
    %v197 = vld [vmem:[#allocation8 + $0x68] sm:$0xff]
    %v198 = vld [vmem:[#allocation8 + $0x70] sm:$0xff]
    %v199 = vld [vmem:[#allocation8 + $0x78] sm:$0xff]
    %200 = vmatprep.subr.mxu0 0.0
    %201 = vmatpush1.msra.mxu0 %v199
    %202 = vmatprep.subr.mxu0 0.0
    %203 = vmatpush1.msra.mxu0 %v198
    %204 = vmatprep.subr.mxu0 0.0
    %205 = vmatpush1.msra.mxu0 %v197
    %206 = vmatprep.subr.mxu0 0.0
    %207 = vmatpush1.msra.mxu0 %v196
    %208 = vmatprep.subr.mxu0 0.0
    %209 = vmatpush1.msra.mxu0 %v195
    %210 = vmatprep.subr.mxu0 0.0
    %211 = vmatpush1.msra.mxu0 %v194
    %212 = vmatprep.subr.mxu0 0.0
    %213 = vmatpush1.msra.mxu0 %v193
    %214 = vmatprep.subr.mxu0 0.0
    %215 = vmatpush1.msra.mxu0 %v192
    %216 = vmatprep.subr.mxu0 0.0
    %217 = vmatpush1.msra.mxu0 %v191
    %218 = vmatprep.subr.mxu0 0.0
    %219 = vmatpush1.msra.mxu0 %v190
    %220 = vmatprep.subr.mxu0 0.0
    %221 = vmatpush1.msra.mxu0 %v189
    %222 = vmatprep.subr.mxu0 0.0
    %223 = vmatpush1.msra.mxu0 %v188
    %224 = vmatprep.subr.mxu0 0.0
    %225 = vmatpush1.msra.mxu0 %v187
    %226 = vmatprep.subr.mxu0 0.0
    %227 = vmatpush1.msra.mxu0 %v186
    %228 = vmatprep.subr.mxu0 0.0
    %229 = vmatpush1.msra.mxu0 %v185
    %230 = vmatprep.subr.mxu0 0.0
    %231 = vmatpush1.msra.mxu0 %v184
    %232 = vmatprep.subr.mxu0 0.0
    %233 = vmatpush2.msra.mxu0 0.0
    %234 = vmatprep.subr.mxu0 0.0
    %235 = vmatpush2.msra.mxu0 0.0
    %236 = vmatprep.subr.mxu0 0.0
    %237 = vmatpush2.msra.mxu0 0.0
    %238 = vmatprep.subr.mxu0 0.0
    %239 = vmatpush2.msra.mxu0 0.0
    %240 = vmatprep.subr.mxu0 0.0
    %241 = vmatpush2.msra.mxu0 0.0
    %242 = vmatprep.subr.mxu0 0.0
    %243 = vmatpush2.msra.mxu0 0.0
    %244 = vmatprep.subr.mxu0 0.0
    %245 = vmatpush2.msra.mxu0 0.0
    %246 = vmatprep.subr.mxu0 0.0
    %247 = vmatpush2.msra.mxu0 0.0
    %248 = vmatprep.subr.mxu0 0.0
    %249 = vmatpush2.msra.mxu0 0.0
    %250 = vmatprep.subr.mxu0 0.0
    %251 = vmatpush2.msra.mxu0 0.0
    %252 = vmatprep.subr.mxu0 0.0
    %253 = vmatpush2.msra.mxu0 0.0
    %254 = vmatprep.subr.mxu0 0.0
    %255 = vmatpush2.msra.mxu0 0.0
    %256 = vmatprep.subr.mxu0 0.0
    %257 = vmatpush2.msra.mxu0 0.0
    %258 = vmatprep.subr.mxu0 0.0
    %259 = vmatpush2.msra.mxu0 0.0
    %260 = vmatprep.subr.mxu0 0.0
    %261 = vmatpush2.msra.mxu0 0.0
    %262 = vmatprep.subr.mxu0 0.0
    %263 = vmatpush2.msra.mxu0 0.0
    %264 = vmatprep.mubr.f32.mxu0 0.0
    %265 = vmatmul.mubr.f32.gmra.mxu0 %v180
    %v266 = vpop.f32.mrf.mxu0
    %v267 = vadd.f32 0.0, %v266
    %v268 = vpop.f32.mrf.mxu0
    %269 = vmatprep.mubr.f32.mxu0 0.0
    %270 = vmatmul.mubr.f32.gmra.mxu0 %v181
    %v271 = vpop.f32.mrf.mxu0
    %v272 = vadd.f32 0.0, %v271
    %v273 = vpop.f32.mrf.mxu0
    %274 = vdwg.mxu0
    %v275 = vadd.f32 %v182, %v267
    %v276 = vadd.f32 %v183, %v272
    %277 = vst [vmem:[#allocation2] sm:$0xff] %v275
    %278 = vst [vmem:[#allocation2 + $0x8] sm:$0xff] %v276
    // Predicated region
    $region38: #{tpu_custom_call.1} parent=1 // pred_check
      %p279 = pneg %p62
    $region39: #{tpu_custom_call.1} parent=1 // pred_check_branch
      %281 = sbr.rel (%p279) target = $region41
    $region40: #{tpu_custom_call.1} parent=1 // pred_region
      %v282 = vld [vmem:[#allocation2] sm:$0xff]
      %v283 = vld [vmem:[#allocation2 + $0x8] sm:$0xff]
      %v284 = vld [vmem:[%s4] sm:$0x1]
      %v286 = vlaneseq
      %v287 = vshrl.u32 %v286, 7
      %v288 = vsub.s32 0, %v287
      %v289 = vrot.slane %v284, %v288
      %v291 = vadd.f32 %v282, %v289
      %v292 = vadd.f32 %v283, %v289
      %293 = vst [vmem:[#allocation9] sm:$0xff] %v291
      %294 = vst [vmem:[#allocation9 + $0x8] sm:$0xff] %v292
    $region41: #{tpu_custom_call.1} parent=1 // pred_fallthru
      _
    // Predicated region
    $region42: #{tpu_custom_call.1} parent=1 // pred_check
      _
    $region43: #{tpu_custom_call.1} parent=1 // pred_check_branch
      %296 = sbr.rel (0) target = $region45
    $region44: #{tpu_custom_call.1} parent=1 // pred_region
      %s298 = ssub.s32 256, 256
      %299 = vsyncadd [#allocation5], %s298
      %s300 = sshll.u32 [#allocation9], 4
      %s301 = int_to_ptr.vmem [resolvable:$true] %s300
      %306 = dma.vmem_to_hbm [thread:$0]  %s301, 256, %s5, [#allocation5], 128, 128, 8
    $region45: #{tpu_custom_call.1} parent=1 // pred_fallthru
      _
    // Predicated region
    $region46: #{tpu_custom_call.1} parent=1 // pred_check
      _
    $region47: #{tpu_custom_call.1} parent=1 // pred_check_branch
      %308 = sbr.rel (0) target = $region49
    $region48: #{tpu_custom_call.1} parent=1 // pred_region
      %309 = dma.done [#allocation5], 256
    $region49: #{tpu_custom_call.1} parent=1 // pred_fallthru
      _
    %310 = vsyncpa [#allocation4], 1
    %311 = vsyncpa [#allocation7], 1
    %312 = vsyncpa [#allocation5], 1

</llo_original>
